<compile_context>
chip_gen: v5e
topology: v5e:2x2
jax: 0.10.0
libtpu: 0.0.40
codegen_flags: <defaults>
</compile_context>

<pallas_src>
import functools

import jax
import jax.numpy as jnp
from jax.experimental import pallas as pl
from jax.experimental.pallas import tpu as pltpu


# VMEM working-set budget (streamed double-buffers + resident small tensors)
# and the explicit scoped-VMEM limit requested from the compiler.  16 MiB of
# working set under a 32 MiB limit fits every generation (v5e/v6e: 128 MiB
# physical, v7x: 64 MiB physical / 32 MiB scoped default) and keeps each
# streamed buffer at <= ~4 MiB.
_VMEM_WORKING_SET_BUDGET = 16 * 1024 * 1024
_VMEM_LIMIT_BYTES = 32 * 1024 * 1024


def _single_vqvae_loss_kernel(
    sample_ref,        # (bm, W)   native dtype, VMEM  (dominant stream)
    target_ref,        # (bm, W)   native dtype, VMEM  (dominant stream)
    label_ref,         # (n|bm, C) native dtype, VMEM
    pred_ref,          # (n|bm, C) native dtype, VMEM
    post_mean_ref,     # (n|bm, Z) native dtype, VMEM
    post_logvar_ref,   # (n|bm, Z) native dtype, VMEM
    prior_mean_ref,    # (n|bm, Z) native dtype, VMEM
    prior_logvar_ref,  # (n|bm, Z) native dtype, VMEM
    out_ref,           # (1, 1, 128) f32, VMEM : lanes 0,1,2 = rec/ret/kl partials
    *,
    block_rows,        # static: rows per big-stream block
    num_rows,          # static: total valid rows of the (reshaped) big stream
    has_remainder,     # static: num_rows % block_rows != 0
    small_resident,    # static: small tensors are full-array resident
):
    pid = pl.program_id(0)
    last = pl.num_programs(0) - 1

    def rec_partial(masked):
        s = sample_ref[...].astype(jnp.float32)
        t = target_ref[...].astype(jnp.float32)
        sq = (s - t) ** 2
        if masked:
            row = jax.lax.broadcasted_iota(jnp.int32, (block_rows, 1), 0)
            valid = (row + pid * block_rows) < num_rows
            # Select (NOT multiply): padded rows may hold inf/NaN garbage.
            sq = jnp.where(valid, sq, 0.0)
        return jnp.sum(sq)

    def small_partials(masked):
        lb = label_ref[...].astype(jnp.float32)
        pr = pred_ref[...].astype(jnp.float32)
        ret = (lb - pr) ** 2
        pm = post_mean_ref[...].astype(jnp.float32)
        plv = post_logvar_ref[...].astype(jnp.float32)
        qm = prior_mean_ref[...].astype(jnp.float32)
        qlv = prior_logvar_ref[...].astype(jnp.float32)
        inv_qvar = jnp.exp(-qlv)
        kl = ((pm - qm) ** 2) * inv_qvar + jnp.exp(plv) * inv_qvar - 1.0 - plv + qlv
        if masked:
            row = jax.lax.broadcasted_iota(jnp.int32, (block_rows, 1), 0)
            valid = (row + pid * block_rows) < num_rows
            ret = jnp.where(valid, ret, 0.0)
            kl = jnp.where(valid, kl, 0.0)
        return jnp.sum(ret), jnp.sum(kl)

    def write(rec_s, ret_s, kl_s):
        # Single lane-dense (1,1,128) output row: one unmasked store.
        lane = jax.lax.broadcasted_iota(jnp.int32, (1, 1, 128), 2)
        out_ref[...] = (jnp.where(lane == 0, rec_s, 0.0)
                        + jnp.where(lane == 1, ret_s, 0.0)
                        + jnp.where(lane == 2, kl_s, 0.0))

    if small_resident:
        # Small tensors are fetched once (constant block index) and stay in
        # VMEM; ret/kl are computed exactly once, at pid == 0.  When
        # has_remainder is True the grid has >= 2 blocks, so pid 0 is full.
        @pl.when(pid == 0)
        def _():
            ret_s, kl_s = small_partials(masked=False)
            write(rec_partial(masked=False), ret_s, kl_s)

        if has_remainder:
            @pl.when(jnp.logical_and(pid != 0, pid != last))
            def _():
                write(rec_partial(masked=False), 0.0, 0.0)

            @pl.when(jnp.logical_and(pid != 0, pid == last))
            def _():
                write(rec_partial(masked=True), 0.0, 0.0)
        else:
            @pl.when(pid != 0)
            def _():
                write(rec_partial(masked=False), 0.0, 0.0)
    else:
        # Streaming fallback: small tensors are tiled on the same batch grid.
        if has_remainder:
            @pl.when(pid != last)
            def _():
                ret_s, kl_s = small_partials(masked=False)
                write(rec_partial(masked=False), ret_s, kl_s)

            @pl.when(pid == last)
            def _():
                ret_s, kl_s = small_partials(masked=True)
                write(rec_partial(masked=True), ret_s, kl_s)
        else:
            ret_s, kl_s = small_partials(masked=False)
            write(rec_partial(masked=False), ret_s, kl_s)


def _sublane_packing(itemsize):
    """Rows per packed sublane group: 8 for f32, 16 for bf16, 32 for int8/fp8."""
    return max(8, 32 // max(int(itemsize), 1))


def _lane_dense_shape(n, ld):
    """Lane-dense 2-D view (rows, width) of the flattened (N, L*D) stream."""
    if ld % 128 == 0:
        return n, ld
    total = n * ld
    for w in (4096, 2048, 1024, 512, 256, 128):
        if total % w == 0:
            return total // w, w
    # No lane-dense factorization; keep (N, L*D) (masked loads, still correct).
    return n, ld


def _choose_rows_per_block(num_rows, stream_row_bytes, packing, budget_bytes,
                           min_blocks=4):
    """Rows per block: fit the double-buffered VMEM budget and aim for
    >= min_blocks blocks so both v7x TensorCores get work."""
    if num_rows <= packing:
        return int(num_rows)
    # VMEM cap: double-buffered streamed bytes per row.
    max_rows = budget_bytes // (2 * max(int(stream_row_bytes), 1))
    max_rows = max(packing, (max_rows // packing) * packing)
    # Occupancy target: >= min_blocks blocks (2 TCs x >= 2 steps on v7x).
    tgt = -(-num_rows // min_blocks)            # ceil-div
    tgt = -(-tgt // packing) * packing          # round up to packing
    bm = max(packing, min(int(max_rows), int(tgt)))
    if bm >= num_rows:
        return int(num_rows)
    return int(bm)


class SingleVQVAELoss:
    """JAX/Pallas port of storm.loss.single_vqvae_loss.SingleVQVAELoss."""

    def __init__(self, cs_scale=1.0, nll_loss_weight=1.0, ret_loss_weight=1.0,
                 kl_loss_weight=1e-6):
        self.cs_scale = cs_scale            # unused in forward (kept for parity)
        self.nll_loss_weight = nll_loss_weight
        self.ret_loss_weight = ret_loss_weight
        self.kl_loss_weight = kl_loss_weight

    def __call__(self, sample, target_sample, label, pred_label,
                 post_mean, post_logvar, prior_mean, prior_logvar,
                 mask=None, if_mask=False, block_rows=None,
                 force_small_resident=None):
        assert sample.shape == target_sample.shape
        # TODO(synk): if_mask=True path not implemented; the reference
        # mask.repeat(1, 1, D) broadcast is ill-defined for an (N, L) mask.
        assert not if_mask

        n, l, d = sample.shape
        ld = l * d
        c = label.shape[-1]
        z = post_mean.shape[-1]

        item_big = jnp.dtype(sample.dtype).itemsize
        packing = _sublane_packing(item_big)

        small_inputs = (label, pred_label, post_mean, post_logvar,
                        prior_mean, prior_logvar)
        resident_bytes = sum(int(x.size) * jnp.dtype(x.dtype).itemsize
                             for x in small_inputs)
        # Resident small tensors (conservatively x2 for buffer allocation)
        # may use at most a quarter of the working-set budget.
        small_resident = (2 * resident_bytes) <= (_VMEM_WORKING_SET_BUDGET // 4)
        if force_small_resident is not None:
            small_resident = bool(force_small_resident)

        if small_resident:
            # Dominant stream gets a lane-dense view independent of N.
            num_rows, width = _lane_dense_shape(n, ld)
            stream_row_bytes = 2 * width * item_big
            stream_budget = _VMEM_WORKING_SET_BUDGET - 2 * resident_bytes
        else:
            # Streaming fallback shares the batch-axis grid with the small
            # tensors, so the big stream must stay (N, L*D).
            num_rows, width = n, ld
            small_row_bytes = sum(int(x.shape[-1]) * jnp.dtype(x.dtype).itemsize
                                  for x in small_inputs)
            stream_row_bytes = 2 * width * item_big + small_row_bytes
            stream_budget = _VMEM_WORKING_SET_BUDGET

        # Row-major contiguous layout-only reshape (no dtype cast, no copy).
        sample2 = sample.reshape(num_rows, width)
        target2 = target_sample.reshape(num_rows, width)

        bm = block_rows if block_rows is not None else _choose_rows_per_block(
            num_rows, stream_row_bytes, packing, stream_budget)
        bm = int(min(bm, num_rows))
        num_blocks = -(-num_rows // bm)
        has_remainder = (num_rows % bm) != 0

        kernel = functools.partial(
            _single_vqvae_loss_kernel,
            block_rows=bm, num_rows=num_rows,
            has_remainder=has_remainder, small_resident=small_resident)

        big_spec = pl.BlockSpec((bm, width), lambda i: (i, 0))
        if small_resident:
            # Constant block index => fetched once, no per-step DMA.
            small_specs = [
                pl.BlockSpec((n, c), lambda i: (0, 0)),
                pl.BlockSpec((n, c), lambda i: (0, 0)),
                pl.BlockSpec((n, z), lambda i: (0, 0)),
                pl.BlockSpec((n, z), lambda i: (0, 0)),
                pl.BlockSpec((n, z), lambda i: (0, 0)),
                pl.BlockSpec((n, z), lambda i: (0, 0)),
            ]
        else:
            small_specs = [
                pl.BlockSpec((bm, c), lambda i: (i, 0)),
                pl.BlockSpec((bm, c), lambda i: (i, 0)),
                pl.BlockSpec((bm, z), lambda i: (i, 0)),
                pl.BlockSpec((bm, z), lambda i: (i, 0)),
                pl.BlockSpec((bm, z), lambda i: (i, 0)),
                pl.BlockSpec((bm, z), lambda i: (i, 0)),
            ]
        in_specs = [big_spec, big_spec] + small_specs

        out_spec = pl.BlockSpec((1, 1, 128), lambda i: (i, 0, 0))
        out_shape = jax.ShapeDtypeStruct((num_blocks, 1, 128), jnp.float32)

        inputs = (sample2, target2, label, pred_label,
                  post_mean, post_logvar, prior_mean, prior_logvar)
        in_bytes = sum(int(x.size) * jnp.dtype(x.dtype).itemsize for x in inputs)
        out_bytes = int(num_blocks) * 128 * 4
        cost = pl.CostEstimate(
            flops=3 * n * ld + 4 * n * c + 9 * n * z,
            transcendentals=2 * n * z,
            bytes_accessed=in_bytes + out_bytes,
        )

        partials = pl.pallas_call(
            kernel,
            out_shape=out_shape,
            grid=(num_blocks,),
            in_specs=in_specs,
            out_specs=out_spec,
            compiler_params=pltpu.CompilerParams(
                dimension_semantics=("parallel",),
                vmem_limit_bytes=_VMEM_LIMIT_BYTES),
            cost_estimate=cost,
        )(*inputs)

        # Final 3-scalar reduction + weighting in the wrapper (tiny XLA ops).
        sums = jnp.sum(partials, axis=(0, 1))            # (128,)
        rec_total = sums[0]
        ret_total = sums[1]
        kl_total = sums[2]

        nll_loss = rec_total / n
        weighted_nll_loss = (self.nll_loss_weight * rec_total) / n
        weighted_ret_loss = (self.ret_loss_weight * (ret_total / c)) / n
        weighted_kl_loss = (self.kl_loss_weight * (0.5 * kl_total)) / n

        return dict(
            nll_loss=nll_loss,
            weighted_nll_loss=weighted_nll_loss,
            weighted_ret_loss=weighted_ret_loss,
            weighted_kl_loss=weighted_kl_loss,
        )


def _reference_loss(sample, target, label, pred, pm, plv, qm, qlv,
                    nll_w=1.0, ret_w=1.0, kl_w=1e-6):
    """Pure-JAX reference mirroring the PyTorch forward (if_mask=False)."""
    sample = sample.astype(jnp.float32)
    target = target.astype(jnp.float32)
    label = label.astype(jnp.float32)
    pred = pred.astype(jnp.float32)
    pm, plv, qm, qlv = (x.astype(jnp.float32) for x in (pm, plv, qm, qlv))
    n = sample.shape[0]
    rec = (sample - target) ** 2
    nll_loss = jnp.sum(rec) / n
    weighted_nll_loss = jnp.sum(nll_w * rec) / n
    ret = jnp.mean((label - pred) ** 2, axis=-1)
    weighted_ret_loss = jnp.sum(ret_w * ret) / n
    kl = 0.5 * jnp.sum(
        (pm - qm) ** 2 / jnp.exp(qlv) + jnp.exp(plv) / jnp.exp(qlv) - 1.0 - plv + qlv,
        axis=1)
    weighted_kl_loss = jnp.sum(kl_w * kl) / n
    return dict(nll_loss=nll_loss, weighted_nll_loss=weighted_nll_loss,
                weighted_ret_loss=weighted_ret_loss,
                weighted_kl_loss=weighted_kl_loss)


def _check(out, ref, rtol=1e-5, atol=1e-5):
    for k in out:
        assert jnp.allclose(out[k], ref[k], rtol=rtol, atol=atol), (k, out[k], ref[k])


def _make_inputs(key, n, l, d, c, z, dtype=jnp.float32):
    ks = jax.random.split(key, 8)
    sample = jax.random.normal(ks[0], (n, l, d), jnp.float32).astype(dtype)
    target = jax.random.normal(ks[1], (n, l, d), jnp.float32).astype(dtype)
    label = jax.random.normal(ks[2], (n, c), jnp.float32).astype(dtype)
    pred = jax.random.normal(ks[3], (n, c), jnp.float32).astype(dtype)
    pm = jax.random.normal(ks[4], (n, z), jnp.float32).astype(dtype)
    plv = (0.1 * jax.random.normal(ks[5], (n, z), jnp.float32)).astype(dtype)
    qm = jax.random.normal(ks[6], (n, z), jnp.float32).astype(dtype)
    qlv = (0.1 * jax.random.normal(ks[7], (n, z), jnp.float32)).astype(dtype)
    return sample, target, label, pred, pm, plv, qm, qlv


if __name__ == "__main__":
    loss_fn = SingleVQVAELoss(cs_scale=1.0, nll_loss_weight=1.0,
                              ret_loss_weight=1.0, kl_loss_weight=1e-6)
    key = jax.random.PRNGKey(0)
    k1, k2, k3, k4, k5 = jax.random.split(key, 5)

    # Case 1: small shapes, single block, resident small tensors
    # (N=2, L=8, D=32, C=16, Z=32), f32.
    args = _make_inputs(k1, 2, 8, 32, 16, 32, jnp.float32)
    out = loss_fn(*args)
    out = jax.tree_util.tree_map(jax.block_until_ready, out)
    _check(out, _reference_loss(*args))

    # Case 2: multi-block grid with a partial last block (N=20 -> 3 blocks of 8
    # rows): exercises the parallel grid axis, resident small-tensor path, and
    # last-block-only masking.
    args = _make_inputs(k2, 20, 8, 32, 16, 32, jnp.float32)
    out = loss_fn(*args)
    out = jax.tree_util.tree_map(jax.block_until_ready, out)
    _check(out, _reference_loss(*args))

    # Case 3: native bf16 inputs (no wrapper-side upcast; f32 accumulation
    # inside the kernel; bf16 sublane packing of 16).
    args = _make_inputs(k3, 16, 8, 32, 16, 32, jnp.bfloat16)
    out = loss_fn(*args)
    out = jax.tree_util.tree_map(jax.block_until_ready, out)
    _check(out, _reference_loss(*args), rtol=1e-4, atol=1e-4)

    # Case 4: L*D not a multiple of 128 (L=6, D=24 -> 144); wrapper flattens
    # the dominant stream to a lane-dense (9, 128) view with a partial block.
    args = _make_inputs(k4, 8, 6, 24, 16, 32, jnp.float32)
    out = loss_fn(*args)
    out = jax.tree_util.tree_map(jax.block_until_ready, out)
    _check(out, _reference_loss(*args))

    # Case 5: force the streaming fallback path for the six small tensors
    # (shared batch grid, masked partial last block for ret/kl too).
    args = _make_inputs(k5, 20, 8, 32, 16, 32, jnp.float32)
    out = loss_fn(*args, block_rows=8, force_small_resident=False)
    out = jax.tree_util.tree_map(jax.block_until_ready, out)
    _check(out, _reference_loss(*args))

    print("KERNEL_OK")
</pallas_src>

<mosaic_0001>
module attributes {stable_mosaic.version = 11 : i64} {
  func.func @_single_vqvae_loss_kernel(%arg0: i32, %arg1: memref<2x256xf32, #tpu.memory_space<vmem>>, %arg2: memref<2x256xf32, #tpu.memory_space<vmem>>, %arg3: memref<2x16xf32, #tpu.memory_space<vmem>>, %arg4: memref<2x16xf32, #tpu.memory_space<vmem>>, %arg5: memref<2x32xf32, #tpu.memory_space<vmem>>, %arg6: memref<2x32xf32, #tpu.memory_space<vmem>>, %arg7: memref<2x32xf32, #tpu.memory_space<vmem>>, %arg8: memref<2x32xf32, #tpu.memory_space<vmem>>, %arg9: memref<1x1x128xf32, #tpu.memory_space<vmem>>) attributes {dimension_semantics = [#tpu.dimension_semantics<parallel>], iteration_bounds = array<i64: 1>, scalar_prefetch = 0 : i64, scratch_operands = 0 : i64, tpu.core_type = #tpu.core_type<tc>, window_params = [{transform_indices = @transform_0, window_bounds = array<i64: 2, 256>}, {transform_indices = @transform_1, window_bounds = array<i64: 2, 256>}, {pipeline_mode = #tpu.pipeline_mode<synchronous>, transform_indices = @transform_2, window_bounds = array<i64: 2, 16>}, {pipeline_mode = #tpu.pipeline_mode<synchronous>, transform_indices = @transform_3, window_bounds = array<i64: 2, 16>}, {pipeline_mode = #tpu.pipeline_mode<synchronous>, transform_indices = @transform_4, window_bounds = array<i64: 2, 32>}, {pipeline_mode = #tpu.pipeline_mode<synchronous>, transform_indices = @transform_5, window_bounds = array<i64: 2, 32>}, {pipeline_mode = #tpu.pipeline_mode<synchronous>, transform_indices = @transform_6, window_bounds = array<i64: 2, 32>}, {pipeline_mode = #tpu.pipeline_mode<synchronous>, transform_indices = @transform_7, window_bounds = array<i64: 2, 32>}, {transform_indices = @transform_8, window_bounds = array<i64: 1, 1, 128>}]} {
    %c0_i32 = arith.constant 0 : i32
    %0 = arith.cmpi eq, %arg0, %c0_i32 : i32
    %1 = arith.extui %0 : i1 to i32
    %c0_i32_0 = arith.constant 0 : i32
    %2 = arith.cmpi ne, %1, %c0_i32_0 : i32
    scf.if %2 {
      %c0 = arith.constant 0 : index
      %c0_3 = arith.constant 0 : index
      %6 = vector.load %arg3[%c0, %c0_3] : memref<2x16xf32, #tpu.memory_space<vmem>>, vector<2x16xf32>
      %c0_4 = arith.constant 0 : index
      %c0_5 = arith.constant 0 : index
      %7 = vector.load %arg4[%c0_4, %c0_5] : memref<2x16xf32, #tpu.memory_space<vmem>>, vector<2x16xf32>
      %8 = arith.subf %6, %7 : vector<2x16xf32>
      %9 = arith.mulf %8, %8 : vector<2x16xf32>
      %c0_6 = arith.constant 0 : index
      %c0_7 = arith.constant 0 : index
      %10 = vector.load %arg5[%c0_6, %c0_7] : memref<2x32xf32, #tpu.memory_space<vmem>>, vector<2x32xf32>
      %c0_8 = arith.constant 0 : index
      %c0_9 = arith.constant 0 : index
      %11 = vector.load %arg6[%c0_8, %c0_9] : memref<2x32xf32, #tpu.memory_space<vmem>>, vector<2x32xf32>
      %c0_10 = arith.constant 0 : index
      %c0_11 = arith.constant 0 : index
      %12 = vector.load %arg7[%c0_10, %c0_11] : memref<2x32xf32, #tpu.memory_space<vmem>>, vector<2x32xf32>
      %c0_12 = arith.constant 0 : index
      %c0_13 = arith.constant 0 : index
      %13 = vector.load %arg8[%c0_12, %c0_13] : memref<2x32xf32, #tpu.memory_space<vmem>>, vector<2x32xf32>
      %cst = arith.constant 0.000000e+00 : f32
      %14 = vector.broadcast %cst : f32 to vector<2x32xf32>
      %15 = arith.subf %14, %13 : vector<2x32xf32>
      %16 = math.exp %15 : vector<2x32xf32>
      %17 = arith.subf %10, %12 : vector<2x32xf32>
      %18 = arith.mulf %17, %17 : vector<2x32xf32>
      %19 = arith.mulf %18, %16 : vector<2x32xf32>
      %20 = math.exp %11 : vector<2x32xf32>
      %21 = arith.mulf %20, %16 : vector<2x32xf32>
      %22 = arith.addf %19, %21 : vector<2x32xf32>
      %cst_14 = arith.constant 1.000000e+00 : f32
      %23 = vector.broadcast %cst_14 : f32 to vector<2x32xf32>
      %24 = arith.subf %22, %23 : vector<2x32xf32>
      %25 = arith.subf %24, %11 : vector<2x32xf32>
      %26 = arith.addf %25, %13 : vector<2x32xf32>
      %27 = vector.shape_cast %9 : vector<2x16xf32> to vector<1x2x16xf32>
      %cst_15 = arith.constant dense<0.000000e+00> : vector<1xf32>
      %28 = vector.multi_reduction <add>, %27, %cst_15 [1, 2] : vector<1x2x16xf32> to vector<1xf32>
      %29 = vector.shape_cast %28 : vector<1xf32> to vector<1x1x1xf32>
      %30 = vector.extract %29[0, 0, 0] : f32 from vector<1x1x1xf32>
      %31 = vector.shape_cast %26 : vector<2x32xf32> to vector<1x2x32xf32>
      %cst_16 = arith.constant dense<0.000000e+00> : vector<1xf32>
      %32 = vector.multi_reduction <add>, %31, %cst_16 [1, 2] : vector<1x2x32xf32> to vector<1xf32>
      %33 = vector.shape_cast %32 : vector<1xf32> to vector<1x1x1xf32>
      %34 = vector.extract %33[0, 0, 0] : f32 from vector<1x1x1xf32>
      %c0_17 = arith.constant 0 : index
      %c0_18 = arith.constant 0 : index
      %35 = vector.load %arg1[%c0_17, %c0_18] : memref<2x256xf32, #tpu.memory_space<vmem>>, vector<2x256xf32>
      %c0_19 = arith.constant 0 : index
      %c0_20 = arith.constant 0 : index
      %36 = vector.load %arg2[%c0_19, %c0_20] : memref<2x256xf32, #tpu.memory_space<vmem>>, vector<2x256xf32>
      %37 = arith.subf %35, %36 : vector<2x256xf32>
      %38 = arith.mulf %37, %37 : vector<2x256xf32>
      %39 = vector.shape_cast %38 : vector<2x256xf32> to vector<1x2x256xf32>
      %cst_21 = arith.constant dense<0.000000e+00> : vector<1xf32>
      %40 = vector.multi_reduction <add>, %39, %cst_21 [1, 2] : vector<1x2x256xf32> to vector<1xf32>
      %41 = vector.shape_cast %40 : vector<1xf32> to vector<1x1x1xf32>
      %42 = vector.extract %41[0, 0, 0] : f32 from vector<1x1x1xf32>
      %43 = tpu.iota {dimensions = array<i32: 2>} : vector<1x1x128xi32>
      %c0_i32_22 = arith.constant 0 : i32
      %44 = vector.broadcast %c0_i32_22 : i32 to vector<1x1x128xi32>
      %45 = arith.cmpi eq, %43, %44 : vector<1x1x128xi32>
      %cst_23 = arith.constant 0.000000e+00 : f32
      %46 = vector.broadcast %42 : f32 to vector<1x1x128xf32>
      %47 = vector.broadcast %cst_23 : f32 to vector<1x1x128xf32>
      %48 = arith.select %45, %46, %47 : vector<1x1x128xi1>, vector<1x1x128xf32>
      %c1_i32 = arith.constant 1 : i32
      %49 = vector.broadcast %c1_i32 : i32 to vector<1x1x128xi32>
      %50 = arith.cmpi eq, %43, %49 : vector<1x1x128xi32>
      %cst_24 = arith.constant 0.000000e+00 : f32
      %51 = vector.broadcast %30 : f32 to vector<1x1x128xf32>
      %52 = vector.broadcast %cst_24 : f32 to vector<1x1x128xf32>
      %53 = arith.select %50, %51, %52 : vector<1x1x128xi1>, vector<1x1x128xf32>
      %54 = arith.addf %48, %53 : vector<1x1x128xf32>
      %c2_i32 = arith.constant 2 : i32
      %55 = vector.broadcast %c2_i32 : i32 to vector<1x1x128xi32>
      %56 = arith.cmpi eq, %43, %55 : vector<1x1x128xi32>
      %cst_25 = arith.constant 0.000000e+00 : f32
      %57 = vector.broadcast %34 : f32 to vector<1x1x128xf32>
      %58 = vector.broadcast %cst_25 : f32 to vector<1x1x128xf32>
      %59 = arith.select %56, %57, %58 : vector<1x1x128xi1>, vector<1x1x128xf32>
      %60 = arith.addf %54, %59 : vector<1x1x128xf32>
      %c0_26 = arith.constant 0 : index
      %c0_27 = arith.constant 0 : index
      %c0_28 = arith.constant 0 : index
      %61 = vector.load %arg9[%c0_26, %c0_27, %c0_28] : memref<1x1x128xf32, #tpu.memory_space<vmem>>, vector<1x1x128xf32>
      tpu.vector_store %arg9[%c0_26, %c0_27, %c0_28], %60 {strides = array<i32>} : memref<1x1x128xf32, #tpu.memory_space<vmem>>, vector<1x1x128xf32>,
    } else {
    }
    %c0_i32_1 = arith.constant 0 : i32
    %3 = arith.cmpi ne, %arg0, %c0_i32_1 : i32
    %4 = arith.extui %3 : i1 to i32
    %c0_i32_2 = arith.constant 0 : i32
    %5 = arith.cmpi ne, %4, %c0_i32_2 : i32
    scf.if %5 {
      %c0 = arith.constant 0 : index
      %c0_3 = arith.constant 0 : index
      %6 = vector.load %arg1[%c0, %c0_3] : memref<2x256xf32, #tpu.memory_space<vmem>>, vector<2x256xf32>
      %c0_4 = arith.constant 0 : index
      %c0_5 = arith.constant 0 : index
      %7 = vector.load %arg2[%c0_4, %c0_5] : memref<2x256xf32, #tpu.memory_space<vmem>>, vector<2x256xf32>
      %8 = arith.subf %6, %7 : vector<2x256xf32>
      %9 = arith.mulf %8, %8 : vector<2x256xf32>
      %10 = vector.shape_cast %9 : vector<2x256xf32> to vector<1x2x256xf32>
      %cst = arith.constant dense<0.000000e+00> : vector<1xf32>
      %11 = vector.multi_reduction <add>, %10, %cst [1, 2] : vector<1x2x256xf32> to vector<1xf32>
      %12 = vector.shape_cast %11 : vector<1xf32> to vector<1x1x1xf32>
      %13 = vector.extract %12[0, 0, 0] : f32 from vector<1x1x1xf32>
      %14 = tpu.iota {dimensions = array<i32: 2>} : vector<1x1x128xi32>
      %c0_i32_6 = arith.constant 0 : i32
      %15 = vector.broadcast %c0_i32_6 : i32 to vector<1x1x128xi32>
      %16 = arith.cmpi eq, %14, %15 : vector<1x1x128xi32>
      %cst_7 = arith.constant 0.000000e+00 : f32
      %17 = vector.broadcast %13 : f32 to vector<1x1x128xf32>
      %18 = vector.broadcast %cst_7 : f32 to vector<1x1x128xf32>
      %19 = arith.select %16, %17, %18 : vector<1x1x128xi1>, vector<1x1x128xf32>
      %c1_i32 = arith.constant 1 : i32
      %20 = vector.broadcast %c1_i32 : i32 to vector<1x1x128xi32>
      %21 = arith.cmpi eq, %14, %20 : vector<1x1x128xi32>
      %cst_8 = arith.constant 0.000000e+00 : f32
      %cst_9 = arith.constant 0.000000e+00 : f32
      %22 = vector.broadcast %cst_8 : f32 to vector<1x1x128xf32>
      %23 = vector.broadcast %cst_9 : f32 to vector<1x1x128xf32>
      %24 = arith.select %21, %22, %23 : vector<1x1x128xi1>, vector<1x1x128xf32>
      %25 = arith.addf %19, %24 : vector<1x1x128xf32>
      %c2_i32 = arith.constant 2 : i32
      %26 = vector.broadcast %c2_i32 : i32 to vector<1x1x128xi32>
      %27 = arith.cmpi eq, %14, %26 : vector<1x1x128xi32>
      %cst_10 = arith.constant 0.000000e+00 : f32
      %cst_11 = arith.constant 0.000000e+00 : f32
      %28 = vector.broadcast %cst_10 : f32 to vector<1x1x128xf32>
      %29 = vector.broadcast %cst_11 : f32 to vector<1x1x128xf32>
      %30 = arith.select %27, %28, %29 : vector<1x1x128xi1>, vector<1x1x128xf32>
      %31 = arith.addf %25, %30 : vector<1x1x128xf32>
      %c0_12 = arith.constant 0 : index
      %c0_13 = arith.constant 0 : index
      %c0_14 = arith.constant 0 : index
      %32 = vector.load %arg9[%c0_12, %c0_13, %c0_14] : memref<1x1x128xf32, #tpu.memory_space<vmem>>, vector<1x1x128xf32>
      tpu.vector_store %arg9[%c0_12, %c0_13, %c0_14], %31 {strides = array<i32>} : memref<1x1x128xf32, #tpu.memory_space<vmem>>, vector<1x1x128xf32>,
    } else {
    }
    return
  }
  func.func @transform_0(%arg0: i32) -> (i32, i32) {
    %c0_i32 = arith.constant 0 : i32
    %c0_i32_0 = arith.constant 0 : i32
    return %arg0, %c0_i32 : i32, i32
  }
  func.func @transform_1(%arg0: i32) -> (i32, i32) {
    %c0_i32 = arith.constant 0 : i32
    %c0_i32_0 = arith.constant 0 : i32
    return %arg0, %c0_i32 : i32, i32
  }
  func.func @transform_2(%arg0: i32) -> (i32, i32) {
    %c0_i32 = arith.constant 0 : i32
    %c0_i32_0 = arith.constant 0 : i32
    %c0_i32_1 = arith.constant 0 : i32
    return %c0_i32, %c0_i32_0 : i32, i32
  }
  func.func @transform_3(%arg0: i32) -> (i32, i32) {
    %c0_i32 = arith.constant 0 : i32
    %c0_i32_0 = arith.constant 0 : i32
    %c0_i32_1 = arith.constant 0 : i32
    return %c0_i32, %c0_i32_0 : i32, i32
  }
  func.func @transform_4(%arg0: i32) -> (i32, i32) {
    %c0_i32 = arith.constant 0 : i32
    %c0_i32_0 = arith.constant 0 : i32
    %c0_i32_1 = arith.constant 0 : i32
    return %c0_i32, %c0_i32_0 : i32, i32
  }
  func.func @transform_5(%arg0: i32) -> (i32, i32) {
    %c0_i32 = arith.constant 0 : i32
    %c0_i32_0 = arith.constant 0 : i32
    %c0_i32_1 = arith.constant 0 : i32
    return %c0_i32, %c0_i32_0 : i32, i32
  }
  func.func @transform_6(%arg0: i32) -> (i32, i32) {
    %c0_i32 = arith.constant 0 : i32
    %c0_i32_0 = arith.constant 0 : i32
    %c0_i32_1 = arith.constant 0 : i32
    return %c0_i32, %c0_i32_0 : i32, i32
  }
  func.func @transform_7(%arg0: i32) -> (i32, i32) {
    %c0_i32 = arith.constant 0 : i32
    %c0_i32_0 = arith.constant 0 : i32
    %c0_i32_1 = arith.constant 0 : i32
    return %c0_i32, %c0_i32_0 : i32, i32
  }
  func.func @transform_8(%arg0: i32) -> (i32, i32, i32) {
    %c0_i32 = arith.constant 0 : i32
    %c0_i32_0 = arith.constant 0 : i32
    %c0_i32_1 = arith.constant 0 : i32
    return %arg0, %c0_i32, %c0_i32_0 : i32, i32, i32
  }
}

</mosaic_0001>

<llo_original>
// kernel: tpu_custom_call.1
$region0: #{tpu_custom_call.1}
  #allocation0 [shape = 'u32[]', space=smem, size = 0x4, offset = 0x4, fixed_abs, tag = 'smem constant byte address 0x4 - core index']
  #allocation1 [shape = 'u32[72,128]{1,0:T(1,128)}', space=vmem, size = 0x9000, scoped, tag = 'internal scratch']
  %s0 = inlined_call_operand.hbm [shape: f32[2,256], index: 0, kind: input, shape index: {}]
  %s1 = inlined_call_operand.hbm [shape: f32[2,256], index: 1, kind: input, shape index: {}]
  %s2 = inlined_call_operand.hbm [shape: f32[2,16], index: 2, kind: input, shape index: {}]
  %s3 = inlined_call_operand.vmem [shape: f32[2,16], index: 3, kind: input, shape index: {}]
  %s4 = inlined_call_operand.hbm [shape: f32[2,32], index: 4, kind: input, shape index: {}]
  %s5 = inlined_call_operand.vmem [shape: f32[2,32], index: 5, kind: input, shape index: {}]
  %s6 = inlined_call_operand.hbm [shape: f32[2,32], index: 6, kind: input, shape index: {}]
  %s7 = inlined_call_operand.vmem [shape: f32[2,32], index: 7, kind: input, shape index: {}]
  %s8 = inlined_call_operand.hbm [shape: f32[1,1,128], index: 8, kind: output, shape index: {}]
  %s9 = sld [smem:[#allocation0]]
  $region70: #{tpu_custom_call.1} parent=0
    _
  %s11 = ssub.s32 1, %s9
  %s12 = scalar_select 0, %s11, %s9
  $region1: #{tpu_custom_call.1} parent=0
    #allocation2 [shape = 'u8[2048]{0}', space=vmem, size = 0x800, scoped, tag = 'input window, operand 0, single buffered']
    #allocation3 [shape = 's32[1]{0}', space=sflag, size = 0x4, scoped, tag = 'scoped memory for tpu_custom_call.1']
    #allocation4 [shape = 's32[1]{0}', space=sflag, size = 0x4, scoped, tag = 'scoped memory for tpu_custom_call.1']
    #allocation5 [shape = 'u8[2048]{0}', space=vmem, size = 0x800, scoped, tag = 'input window, operand 1, single buffered']
    #allocation6 [shape = 's32[1]{0}', space=sflag, size = 0x4, scoped, tag = 'scoped memory for tpu_custom_call.1']
    #allocation7 [shape = 'u8[1024]{0}', space=vmem, size = 0x400, scoped, tag = 'input window, operand 2, single buffered']
    #allocation8 [shape = 'u8[1024]{0}', space=vmem, size = 0x400, scoped, tag = 'input window, operand 4, single buffered']
    #allocation9 [shape = 's32[1]{0}', space=sflag, size = 0x4, scoped, tag = 'scoped memory for tpu_custom_call.1']
    #allocation10 [shape = 'u8[1024]{0}', space=vmem, size = 0x400, scoped, tag = 'input window, operand 6, single buffered']
    #allocation11 [shape = 'u8[512]{0}', space=vmem, size = 0x400, scoped, tag = 'output window, operand 0, single buffered']
    %13 = vsyncpa [#allocation3], 0
    %14 = vsyncpa [#allocation6], 0
    %15 = vsyncpa [#allocation9], 0
    %16 = vsyncpa [#allocation4], 0
    // Predicated region
    $region2: #{tpu_custom_call.1} parent=1 // pred_check
      _
    $region3: #{tpu_custom_call.1} parent=1 // pred_check_branch
      %18 = sbr.rel (0) target = $region5
    $region4: #{tpu_custom_call.1} parent=1 // pred_region
      %20 = vsyncadd [#allocation3], 0
      %s22 = sshll.u32 %s0, 4
      %s23 = int_to_ptr.hbm [resolvable:$true] %s22
      %s24 = sshll.u32 [#allocation2], 4
      %s25 = int_to_ptr.vmem [resolvable:$true] %s24
      %27 = dma.hbm_to_vmem [thread:$0]  %s23, 64, %s25, [#allocation3]
    $region5: #{tpu_custom_call.1} parent=1 // pred_fallthru
      _
    // Predicated region
    $region6: #{tpu_custom_call.1} parent=1 // pred_check
      _
    $region7: #{tpu_custom_call.1} parent=1 // pred_check_branch
      %29 = sbr.rel (0) target = $region9
    $region8: #{tpu_custom_call.1} parent=1 // pred_region
      %31 = vsyncadd [#allocation6], 0
      %s33 = sshll.u32 %s1, 4
      %s34 = int_to_ptr.hbm [resolvable:$true] %s33
      %s35 = sshll.u32 [#allocation5], 4
      %s36 = int_to_ptr.vmem [resolvable:$true] %s35
      %38 = dma.hbm_to_vmem [thread:$0]  %s34, 64, %s36, [#allocation6]
    $region9: #{tpu_custom_call.1} parent=1 // pred_fallthru
      _
    // Predicated region
    $region10: #{tpu_custom_call.1} parent=1 // pred_check
      _
    $region11: #{tpu_custom_call.1} parent=1 // pred_check_branch
      %40 = sbr.rel (0) target = $region13
    $region12: #{tpu_custom_call.1} parent=1 // pred_region
      %42 = vsyncadd [#allocation6], 0
      %s44 = sshll.u32 %s2, 4
      %s45 = int_to_ptr.hbm [resolvable:$true] %s44
      %s46 = sshll.u32 [#allocation7], 4
      %s47 = int_to_ptr.vmem [resolvable:$true] %s46
      %49 = dma.hbm_to_vmem [thread:$0]  %s45, 32, %s47, [#allocation6]
    $region13: #{tpu_custom_call.1} parent=1 // pred_fallthru
      _
    // Predicated region
    $region14: #{tpu_custom_call.1} parent=1 // pred_check
      _
    $region15: #{tpu_custom_call.1} parent=1 // pred_check_branch
      %51 = sbr.rel (0) target = $region17
    $region16: #{tpu_custom_call.1} parent=1 // pred_region
      _
    $region17: #{tpu_custom_call.1} parent=1 // pred_fallthru
      _
    // Predicated region
    $region18: #{tpu_custom_call.1} parent=1 // pred_check
      _
    $region19: #{tpu_custom_call.1} parent=1 // pred_check_branch
      %53 = sbr.rel (0) target = $region21
    $region20: #{tpu_custom_call.1} parent=1 // pred_region
      %55 = vsyncadd [#allocation9], 0
      %s57 = sshll.u32 %s4, 4
      %s58 = int_to_ptr.hbm [resolvable:$true] %s57
      %s59 = sshll.u32 [#allocation8], 4
      %s60 = int_to_ptr.vmem [resolvable:$true] %s59
      %62 = dma.hbm_to_vmem [thread:$0]  %s58, 32, %s60, [#allocation9]
    $region21: #{tpu_custom_call.1} parent=1 // pred_fallthru
      _
    // Predicated region
    $region22: #{tpu_custom_call.1} parent=1 // pred_check
      _
    $region23: #{tpu_custom_call.1} parent=1 // pred_check_branch
      %64 = sbr.rel (0) target = $region25
    $region24: #{tpu_custom_call.1} parent=1 // pred_region
      _
    $region25: #{tpu_custom_call.1} parent=1 // pred_fallthru
      _
    // Predicated region
    $region26: #{tpu_custom_call.1} parent=1 // pred_check
      _
    $region27: #{tpu_custom_call.1} parent=1 // pred_check_branch
      %66 = sbr.rel (0) target = $region29
    $region28: #{tpu_custom_call.1} parent=1 // pred_region
      %68 = vsyncadd [#allocation9], 0
      %s70 = sshll.u32 %s6, 4
      %s71 = int_to_ptr.hbm [resolvable:$true] %s70
      %s72 = sshll.u32 [#allocation10], 4
      %s73 = int_to_ptr.vmem [resolvable:$true] %s72
      %75 = dma.hbm_to_vmem [thread:$0]  %s71, 32, %s73, [#allocation9]
    $region29: #{tpu_custom_call.1} parent=1 // pred_fallthru
      _
    // Predicated region
    $region30: #{tpu_custom_call.1} parent=1 // pred_check
      _
    $region31: #{tpu_custom_call.1} parent=1 // pred_check_branch
      %77 = sbr.rel (0) target = $region33
    $region32: #{tpu_custom_call.1} parent=1 // pred_region
      _
    $region33: #{tpu_custom_call.1} parent=1 // pred_fallthru
      _
    // Predicated region
    $region34: #{tpu_custom_call.1} parent=1 // pred_check
      _
    $region35: #{tpu_custom_call.1} parent=1 // pred_check_branch
      %79 = sbr.rel (0) target = $region37
    $region36: #{tpu_custom_call.1} parent=1 // pred_region
      %81 = dma.done [#allocation3], 64
    $region37: #{tpu_custom_call.1} parent=1 // pred_fallthru
      _
    // Predicated region
    $region38: #{tpu_custom_call.1} parent=1 // pred_check
      _
    $region39: #{tpu_custom_call.1} parent=1 // pred_check_branch
      %83 = sbr.rel (0) target = $region41
    $region40: #{tpu_custom_call.1} parent=1 // pred_region
      %85 = dma.done [#allocation6], 64
    $region41: #{tpu_custom_call.1} parent=1 // pred_fallthru
      _
    // Predicated region
    $region42: #{tpu_custom_call.1} parent=1 // pred_check
      _
    $region43: #{tpu_custom_call.1} parent=1 // pred_check_branch
      %87 = sbr.rel (0) target = $region45
    $region44: #{tpu_custom_call.1} parent=1 // pred_region
      %89 = dma.done [#allocation6], 32
    $region45: #{tpu_custom_call.1} parent=1 // pred_fallthru
      _
    // Predicated region
    $region46: #{tpu_custom_call.1} parent=1 // pred_check
      _
    $region47: #{tpu_custom_call.1} parent=1 // pred_check_branch
      %91 = sbr.rel (0) target = $region49
    $region48: #{tpu_custom_call.1} parent=1 // pred_region
      %93 = dma.done [#allocation9], 32
    $region49: #{tpu_custom_call.1} parent=1 // pred_fallthru
      _
    // Predicated region
    $region50: #{tpu_custom_call.1} parent=1 // pred_check
      _
    $region51: #{tpu_custom_call.1} parent=1 // pred_check_branch
      %95 = sbr.rel (0) target = $region53
    $region52: #{tpu_custom_call.1} parent=1 // pred_region
      %97 = dma.done [#allocation9], 32
    $region53: #{tpu_custom_call.1} parent=1 // pred_fallthru
      _
    %p98 = scmp.eq.s32.totalorder 0, 0
    // Predicated region
    $region54: #{tpu_custom_call.1} parent=1 // pred_check
      %p99 = pneg %p98
    $region55: #{tpu_custom_call.1} parent=1 // pred_check_branch
      %101 = sbr.rel (%p99) target = $region57
    $region56: #{tpu_custom_call.1} parent=1 // pred_region
      %v102 = vld [vmem:[#allocation7] sm:$0x3]
      %v103 = vld [vmem:[%s3] sm:$0x3]
      %v104 = vsub.f32 %v102, %v103
      %v105 = vmul.f32 %v104, %v104
      %v106 = vld [vmem:[#allocation8] sm:$0x3]
      %v107 = vld [vmem:[%s5] sm:$0x3]
      %v108 = vld [vmem:[#allocation10] sm:$0x3]
      %v109 = vld [vmem:[%s7] sm:$0x3]
      %v110 = vsub.f32 0.0, %v109
      %v111 = vmul.f32 %v110, 1.442695
      %v112 = vpow.pop %v111
      %v113 = vsub.f32 %v106, %v108
      %v114 = vmul.f32 %v113, %v113
      %v115 = vmul.f32 %v114, %v112
      %v116 = vmul.f32 %v107, 1.442695
      %v117 = vpow.pop %v116
      %v118 = vmul.f32 %v117, %v112
      %v119 = vadd.f32 %v115, %v118
      %v120 = vsub.f32 %v119, 1.0
      %v121 = vsub.f32 %v120, %v107
      %v122 = vadd.f32 %v121, %v109
      %vm123 = vcmask 123904
      %v124 = vsel %vm123, %v105, 0.0
      %125 = vadd.xlane.f32.xlu0 %v124
      %v126 = vpop.xlane.xlu0 %125
      %v127 = vrot.slane %v126, 4
      %v128 = vadd.f32 %v126, %v127
      %v129 = vrot.slane %v128, 2
      %v130 = vadd.f32 %v128, %v129
      %v131 = vrot.slane %v130, 1
      %v132 = vadd.f32 %v130, %v131
      %s133 = vtos %v132
      %vm134 = vcmask 254976
      %v135 = vsel %vm134, %v122, 0.0
      %136 = vadd.xlane.f32.xlu0 %v135
      %v137 = vpop.xlane.xlu0 %136
      %v138 = vrot.slane %v137, 4
      %v139 = vadd.f32 %v137, %v138
      %v140 = vrot.slane %v139, 2
      %v141 = vadd.f32 %v139, %v140
      %v142 = vrot.slane %v141, 1
      %v143 = vadd.f32 %v141, %v142
      %s144 = vtos %v143
      %v145 = vld [vmem:[#allocation2] sm:$0xf]
      %v146 = vld [vmem:[#allocation5] sm:$0xf]
      %v147 = vsub.f32 %v145, %v146
      %v148 = vmul.f32 %v147, %v147
      %150 = vst [vmem:[#allocation1] ss:$4 sm:$0xff] %v148
      %v151 = vld.sshfl [vmem:[#allocation1] sm:$0xff pattern:$0x73625140]
      %v152 = vld.sshfl [vmem:[#allocation1 + $0x8] sm:$0xff pattern:$0x73625140]
      %vm155 = vcmask 1041408
      %v156 = vsel %vm155, %v151, 0.0
      %v157 = vsel %vm155, %v152, 0.0
      %v158 = vadd.f32 %v156, %v157
      %159 = vadd.xlane.f32.xlu0 %v158
      %v160 = vpop.xlane.xlu0 %159
      %v161 = vrot.slane %v160, 4
      %v162 = vadd.f32 %v160, %v161
      %v163 = vrot.slane %v162, 2
      %v164 = vadd.f32 %v162, %v163
      %v165 = vrot.slane %v164, 1
      %v166 = vadd.f32 %v164, %v165
      %s167 = vtos %v166
      %v168 = vlaneseq
      %v169 = vand.u32 %v168, 127
      %vm170 = vcmp.eq.s32.totalorder %v169, 0
      %v171 = vstv %s167
      %v172 = vsel %vm170, %v171, 0.0
      %vm173 = vcmp.eq.s32.totalorder %v169, 1
      %v174 = vstv %s133
      %v175 = vsel %vm173, %v174, 0.0
      %v176 = vadd.f32 %v172, %v175
      %vm177 = vcmp.eq.s32.totalorder %v169, 2
      %v178 = vstv %s144
      %v179 = vsel %vm177, %v178, 0.0
      %v180 = vadd.f32 %v176, %v179
      %181 = vst [vmem:[#allocation11] sm:$0x1] %v180
    $region57: #{tpu_custom_call.1} parent=1 // pred_fallthru
      _
    %p182 = scmp.ne.s32.totalorder 0, 0
    // Predicated region
    $region58: #{tpu_custom_call.1} parent=1 // pred_check
      %p183 = pneg %p182
    $region59: #{tpu_custom_call.1} parent=1 // pred_check_branch
      %185 = sbr.rel (%p183) target = $region61
    $region60: #{tpu_custom_call.1} parent=1 // pred_region
      %v186 = vld [vmem:[#allocation2] sm:$0xf]
      %v187 = vld [vmem:[#allocation5] sm:$0xf]
      %v188 = vsub.f32 %v186, %v187
      %v189 = vmul.f32 %v188, %v188
      %191 = vst [vmem:[#allocation1] ss:$4 sm:$0xff] %v189
      %v192 = vld.sshfl [vmem:[#allocation1] sm:$0xff pattern:$0x73625140]
      %v193 = vld.sshfl [vmem:[#allocation1 + $0x8] sm:$0xff pattern:$0x73625140]
      %vm196 = vcmask 1041408
      %v197 = vsel %vm196, %v192, 0.0
      %v198 = vsel %vm196, %v193, 0.0
      %v199 = vadd.f32 %v197, %v198
      %200 = vadd.xlane.f32.xlu0 %v199
      %v201 = vpop.xlane.xlu0 %200
      %v202 = vrot.slane %v201, 4
      %v203 = vadd.f32 %v201, %v202
      %v204 = vrot.slane %v203, 2
      %v205 = vadd.f32 %v203, %v204
      %v206 = vrot.slane %v205, 1
      %v207 = vadd.f32 %v205, %v206
      %s208 = vtos %v207
      %v209 = vlaneseq
      %v210 = vand.u32 %v209, 127
      %vm211 = vcmp.eq.s32.totalorder %v210, 0
      %v212 = vstv %s208
      %v213 = vsel %vm211, %v212, 0.0
      %v214 = vadd.f32 %v213, 0.0
      %v215 = vadd.f32 %v214, 0.0
      %216 = vst [vmem:[#allocation11] sm:$0x1] %v215
    $region61: #{tpu_custom_call.1} parent=1 // pred_fallthru
      _
    // Predicated region
    $region62: #{tpu_custom_call.1} parent=1 // pred_check
      _
    $region63: #{tpu_custom_call.1} parent=1 // pred_check_branch
      %218 = sbr.rel (0) target = $region65
    $region64: #{tpu_custom_call.1} parent=1 // pred_region
      %220 = vsyncadd [#allocation4], 0
      %s222 = sshll.u32 [#allocation11], 4
      %s223 = int_to_ptr.vmem [resolvable:$true] %s222
      %s224 = sshll.u32 %s8, 4
      %s225 = int_to_ptr.hbm [resolvable:$true] %s224
      %227 = dma.vmem_to_hbm [thread:$0]  %s223, 16, %s225, [#allocation4]
    $region65: #{tpu_custom_call.1} parent=1 // pred_fallthru
      _
    // Predicated region
    $region66: #{tpu_custom_call.1} parent=1 // pred_check
      _
    $region67: #{tpu_custom_call.1} parent=1 // pred_check_branch
      %229 = sbr.rel (0) target = $region69
    $region68: #{tpu_custom_call.1} parent=1 // pred_region
      %231 = dma.done [#allocation4], 16
    $region69: #{tpu_custom_call.1} parent=1 // pred_fallthru
      _
    %232 = vsyncpa [#allocation3], 1
    %233 = vsyncpa [#allocation6], 1
    %234 = vsyncpa [#allocation9], 1
    %235 = vsyncpa [#allocation4], 1

</llo_original>
